<compile_context>
chip_gen: v7x
topology: tpu7x:2x2x1
jax: 0.10.0
libtpu: 0.0.40
codegen_flags: <defaults>
</compile_context>

<pallas_src>
import jax
import jax.numpy as jnp
from jax.experimental import pallas as pl
from jax.experimental.pallas import tpu as pltpu

_LANE = 128
_SUB = 8
_BLOCK_ELEMS = _LANE * _SUB  # 1024


# ----------------------------------------------------------------------------
# Kernels (operate on lane-dense (TR, 128) tiles, TR a multiple of 8)
# ----------------------------------------------------------------------------
def _anydoor_patch_kernel(img_ref, uap_ref, mask_ref, out_ref):
    # img_ref : (1, TR, 128) image tile for the current batch element
    # uap_ref : (TR, 128)    universal adversarial perturbation tile
    # mask_ref: (TR, 128)    patch mask tile (1 inside patch, 0 outside)
    img = img_ref[0].astype(jnp.float32)
    uap = uap_ref[...].astype(jnp.float32)
    mask = mask_ref[...].astype(jnp.float32)
    # (1 - mask) * img + uap * mask  ==  img + mask * (uap - img)
    adv = img + mask * (uap - img)
    # clamp(adv, 0, 1) then (x - 0.5) / 0.5  ==  clip(2*adv - 1, -1, 1)
    out_ref[0] = jnp.clip(2.0 * adv - 1.0, -1.0, 1.0).astype(out_ref.dtype)


def _anydoor_pixel_kernel(img_ref, uap_ref, out_ref):
    img = img_ref[0].astype(jnp.float32)
    uap = uap_ref[...].astype(jnp.float32)
    adv = img + uap                                # pixel attack: img_ori + uap
    out_ref[0] = jnp.clip(2.0 * adv - 1.0, -1.0, 1.0).astype(out_ref.dtype)


# ----------------------------------------------------------------------------
# Helpers
# ----------------------------------------------------------------------------
def _vmem_defaults(vmem_budget_bytes, vmem_limit_bytes):
    """Pick per-generation VMEM budget/limit from the chip's actual capacity."""
    if vmem_budget_bytes is not None and vmem_limit_bytes is not None:
        return vmem_budget_bytes, vmem_limit_bytes
    try:
        cap = int(getattr(pltpu.get_tpu_info(), "vmem_capacity_bytes",
                          64 * 1024 * 1024))
    except Exception:
        cap = 64 * 1024 * 1024                       # conservative (v7x) default
    if vmem_budget_bytes is None:
        vmem_budget_bytes = cap // 2                 # 32 MiB v7x / 64 MiB v6e
    if vmem_limit_bytes is None:
        vmem_limit_bytes = (cap * 3) // 4            # 48 MiB v7x / 96 MiB v6e
    return vmem_budget_bytes, vmem_limit_bytes


def _choose_tile_rows(R, per_elem_bytes, vmem_budget_bytes):
    """Largest multiple-of-8 row tile dividing R whose double-buffered
    residency fits the VMEM budget (R is always a multiple of 8)."""
    max_rows = max(_SUB, (vmem_budget_bytes // per_elem_bytes) // _LANE)
    max_rows = (max_rows // _SUB) * _SUB
    best = _SUB
    t = _SUB
    while t <= R:
        if R % t == 0 and t <= max_rows:
            best = t
        t += _SUB
    return best


def _largest_divisor_leq(R, limit):
    """Largest multiple-of-8 divisor of R that is <= limit (R % 8 == 0)."""
    best = _SUB
    t = _SUB
    while t <= limit:
        if R % t == 0:
            best = t
        t += _SUB
    return best


# ----------------------------------------------------------------------------
# Wrapper
# ----------------------------------------------------------------------------
def anydoor_pixel_values(img_ori, uap, uap_mask=None, *, patch_attack=True,
                         vmem_budget_bytes=None, vmem_limit_bytes=None):
    """Compute pixel_values_adv (bf16) from img_ori, uap, uap_mask.

    img_ori : [B, C, H, W] float32 or bfloat16 in [0, 1]
    uap     : [C, H, W]    float32 or bfloat16
    uap_mask: [C, H, W]    (patch attack only) float32 / bfloat16
    returns : [B, C, H, W] bfloat16

    Note: feed uap / uap_mask already stored in bf16 at their source (not a
    per-call astype) to halve their HBM reads; the kernel upcasts to f32.
    """
    B, C, H, W = img_ori.shape
    total = C * H * W
    if patch_attack and uap_mask is None:
        raise ValueError("patch_attack=True requires uap_mask")

    vmem_budget_bytes, vmem_limit_bytes = _vmem_defaults(
        vmem_budget_bytes, vmem_limit_bytes)

    # Lane-dense, sublane-dense layout: merge C into the flat spatial axis and
    # reshape to [..., R, 128] with R a multiple of 8 (pad only if needed).
    total_pad = pl.cdiv(total, _BLOCK_ELEMS) * _BLOCK_ELEMS
    R = total_pad // _LANE                                 # multiple of 8

    def to_slab(x, lead_batch):
        x = x.reshape((B, total) if lead_batch else (total,))
        if total_pad != total:
            pad = total_pad - total
            widths = ((0, 0), (0, pad)) if lead_batch else ((0, pad),)
            x = jnp.pad(x, widths)
        return x.reshape((B, R, _LANE) if lead_batch else (R, _LANE))

    img_flat = to_slab(img_ori, True)
    uap_flat = to_slab(uap, False)
    mask_flat = to_slab(uap_mask, False) if patch_attack else None

    # Double-buffered VMEM residency per flat element, using the real dtypes.
    def isz(x):
        return jnp.dtype(x.dtype).itemsize

    per_elem = 2 * isz(img_flat) + 2 * 2 + 2 * isz(uap_flat)   # img + out(bf16) + uap
    if patch_attack:
        per_elem += 2 * isz(mask_flat)

    TR = _choose_tile_rows(R, per_elem, vmem_budget_bytes)
    n_chunks = R // TR

    # v7x has 2 TensorCores: make sure there are >=2 steps along a parallel
    # axis whenever the problem is large enough to split.
    if n_chunks * B < 2 and R >= 2 * _SUB:
        TR = _largest_divisor_leq(R, R // 2)
        n_chunks = R // TR

    img_spec = pl.BlockSpec((1, TR, _LANE), lambda t, b: (b, t, 0))
    out_spec = pl.BlockSpec((1, TR, _LANE), lambda t, b: (b, t, 0))
    # chunk-only index_map: constant across the inner batch loop -> the
    # pipeline skips re-DMAing uap / mask for every batch element.
    uap_spec = pl.BlockSpec((TR, _LANE), lambda t, b: (t, 0))

    if patch_attack:
        mask_spec = pl.BlockSpec((TR, _LANE), lambda t, b: (t, 0))
        kernel = _anydoor_patch_kernel
        in_specs = [img_spec, uap_spec, mask_spec]
        args = (img_flat, uap_flat, mask_flat)
    else:
        # Pixel path: no mask input at all -> no wasted DMA / VMEM.
        kernel = _anydoor_pixel_kernel
        in_specs = [img_spec, uap_spec]
        args = (img_flat, uap_flat)

    out_flat = pl.pallas_call(
        kernel,
        out_shape=jax.ShapeDtypeStruct((B, R, _LANE), jnp.bfloat16),
        grid_spec=pltpu.PrefetchScalarGridSpec(
            num_scalar_prefetch=0,
            grid=(n_chunks, B),                 # chunk outer, batch inner
            in_specs=in_specs,
            out_specs=out_spec,
        ),
        compiler_params=pltpu.CompilerParams(
            dimension_semantics=("parallel", "parallel"),
            vmem_limit_bytes=vmem_limit_bytes,
        ),
    )(*args)

    out = out_flat.reshape(B, total_pad)
    if total_pad != total:
        out = out[:, :total]
    return out.reshape(B, C, H, W)


def anydoor_forward(vlm_prompt_ids, vlm_input_ids, vlm_input_attn,
                    vlm_label_ids, img_ori, uap, uap_mask,
                    *, patch_attack=True, NOT_SSA=True):
    """Pallas re-implementation of Anydoor.forward (up to the VLM call)."""
    if not NOT_SSA:
        # TODO(synk): get_img_idct (spectrum-simulation DCT/IDCT augmentation)
        # is not defined in the module source; only the NOT_SSA path is done.
        raise NotImplementedError("SSA (get_img_idct) path not implemented")

    pixel_values_adv = anydoor_pixel_values(
        img_ori, uap, uap_mask, patch_attack=patch_attack)

    # TODO(synk): self.vlm(...) forward loss, self.vlm.generate(...) and
    # tokenizer batch_decode are external VLM ops with no Pallas equivalent;
    # this returns the normalized bf16 pixel_values_adv fed to the VLM.
    return pixel_values_adv


# ----------------------------------------------------------------------------
# Self-test
# ----------------------------------------------------------------------------
if __name__ == "__main__":
    B, C, H, W = 2, 3, 16, 16          # image batch, NCHW
    seq = 8                            # token sequence length (unused here)

    key = jax.random.PRNGKey(0)
    k_img, k_uap = jax.random.split(key)

    img_ori = jax.random.uniform(k_img, (B, C, H, W), dtype=jnp.float32)
    uap = 0.1 * jax.random.normal(k_uap, (C, H, W), dtype=jnp.float32)

    # Patch mask: ones in the top-left 8x8 corner, zeros elsewhere.
    uap_mask = jnp.zeros((C, H, W), dtype=jnp.float32)
    uap_mask = uap_mask.at[:, :8, :8].set(1.0)

    # Dummy token tensors mirroring the module signature (not consumed).
    vlm_prompt_ids = jnp.arange(B * seq, dtype=jnp.int32).reshape(B, seq)
    vlm_input_ids = vlm_prompt_ids
    vlm_input_attn = jnp.ones((B, seq), dtype=jnp.int32)
    vlm_label_ids = vlm_prompt_ids

    # --- patch-attack path (C*H*W = 768 -> padded to 1024, R = 8) ---
    out_patch = anydoor_forward(vlm_prompt_ids, vlm_input_ids, vlm_input_attn,
                                vlm_label_ids, img_ori, uap, uap_mask,
                                patch_attack=True, NOT_SSA=True)
    out_patch = jax.block_until_ready(out_patch)
    adv_ref = jnp.clip((1.0 - uap_mask) * img_ori + uap * uap_mask, 0.0, 1.0)
    ref_patch = ((adv_ref - 0.5) / 0.5).astype(jnp.bfloat16)
    assert out_patch.shape == (B, C, H, W) and out_patch.dtype == jnp.bfloat16
    assert jnp.allclose(out_patch.astype(jnp.float32),
                        ref_patch.astype(jnp.float32), atol=2e-2, rtol=2e-2)

    # --- pixel-attack path (no mask input at all) ---
    out_pixel = anydoor_pixel_values(img_ori, uap, None, patch_attack=False)
    out_pixel = jax.block_until_ready(out_pixel)
    ref_pixel = ((jnp.clip(img_ori + uap, 0.0, 1.0) - 0.5) / 0.5
                 ).astype(jnp.bfloat16)
    assert jnp.allclose(out_pixel.astype(jnp.float32),
                        ref_pixel.astype(jnp.float32), atol=2e-2, rtol=2e-2)

    # --- chunked-tile path (tiny budget forces multiple row chunks) ---
    H2 = W2 = 32                        # C*H*W = 3072 -> R = 24, TR = 8
    img2 = jax.random.uniform(jax.random.PRNGKey(1), (B, C, H2, W2),
                              dtype=jnp.float32)
    uap2 = 0.05 * jax.random.normal(jax.random.PRNGKey(2), (C, H2, W2),
                                    dtype=jnp.float32)
    mask2 = jnp.zeros((C, H2, W2), dtype=jnp.float32).at[:, :16, :16].set(1.0)
    out2 = anydoor_pixel_values(img2, uap2, mask2, patch_attack=True,
                                vmem_budget_bytes=32 * 1024,
                                vmem_limit_bytes=8 * 1024 * 1024)
    out2 = jax.block_until_ready(out2)
    ref2 = ((jnp.clip((1.0 - mask2) * img2 + uap2 * mask2, 0.0, 1.0) - 0.5)
            / 0.5).astype(jnp.bfloat16)
    assert jnp.allclose(out2.astype(jnp.float32),
                        ref2.astype(jnp.float32), atol=2e-2, rtol=2e-2)

    # --- B=1 path (exercises the >=2-grid-step split for v7x megacore) ---
    img3 = img2[:1]
    out3 = anydoor_pixel_values(img3, uap2, None, patch_attack=False)
    out3 = jax.block_until_ready(out3)
    ref3 = ((jnp.clip(img3 + uap2, 0.0, 1.0) - 0.5) / 0.5).astype(jnp.bfloat16)
    assert jnp.allclose(out3.astype(jnp.float32),
                        ref3.astype(jnp.float32), atol=2e-2, rtol=2e-2)

    # --- bf16-input path (img/uap/mask stored bf16 at the source) ---
    img_bf = img_ori.astype(jnp.bfloat16)
    uap_bf = uap.astype(jnp.bfloat16)
    mask_bf = uap_mask.astype(jnp.bfloat16)
    out_bf = anydoor_pixel_values(img_bf, uap_bf, mask_bf, patch_attack=True)
    out_bf = jax.block_until_ready(out_bf)
    adv_bf_ref = jnp.clip(
        (1.0 - mask_bf.astype(jnp.float32)) * img_bf.astype(jnp.float32)
        + uap_bf.astype(jnp.float32) * mask_bf.astype(jnp.float32), 0.0, 1.0)
    ref_bf = ((adv_bf_ref - 0.5) / 0.5).astype(jnp.bfloat16)
    assert jnp.allclose(out_bf.astype(jnp.float32),
                        ref_bf.astype(jnp.float32), atol=2e-2, rtol=2e-2)

    print("KERNEL_OK")
</pallas_src>

<mosaic_0001>
module attributes {stable_mosaic.version = 11 : i64} {
  func.func @_anydoor_patch_kernel(%arg0: i32, %arg1: i32, %arg2: memref<1x8x128xf32, #tpu.memory_space<vmem>>, %arg3: memref<8x128xf32, #tpu.memory_space<vmem>>, %arg4: memref<8x128xf32, #tpu.memory_space<vmem>>, %arg5: memref<1x8x128xbf16, #tpu.memory_space<vmem>>) attributes {dimension_semantics = [#tpu.dimension_semantics<parallel>, #tpu.dimension_semantics<parallel>], iteration_bounds = array<i64: 1, 2>, scalar_prefetch = 0 : i64, scratch_operands = 0 : i64, tpu.core_type = #tpu.core_type<tc>, window_params = [{transform_indices = @transform_0, window_bounds = array<i64: 1, 8, 128>}, {transform_indices = @transform_1, window_bounds = array<i64: 8, 128>}, {transform_indices = @transform_2, window_bounds = array<i64: 8, 128>}, {transform_indices = @transform_3, window_bounds = array<i64: 1, 8, 128>}]} {
    %c0 = arith.constant 0 : index
    %c0_0 = arith.constant 0 : index
    %c0_1 = arith.constant 0 : index
    %0 = vector.load %arg2[%c0, %c0_0, %c0_1] : memref<1x8x128xf32, #tpu.memory_space<vmem>>, vector<1x8x128xf32>
    %1 = vector.shape_cast %0 : vector<1x8x128xf32> to vector<8x128xf32>
    %c0_2 = arith.constant 0 : index
    %c0_3 = arith.constant 0 : index
    %2 = vector.load %arg3[%c0_2, %c0_3] : memref<8x128xf32, #tpu.memory_space<vmem>>, vector<8x128xf32>
    %c0_4 = arith.constant 0 : index
    %c0_5 = arith.constant 0 : index
    %3 = vector.load %arg4[%c0_4, %c0_5] : memref<8x128xf32, #tpu.memory_space<vmem>>, vector<8x128xf32>
    %4 = arith.subf %2, %1 : vector<8x128xf32>
    %5 = arith.mulf %3, %4 : vector<8x128xf32>
    %6 = arith.addf %1, %5 : vector<8x128xf32>
    %cst = arith.constant 2.000000e+00 : f32
    %7 = vector.broadcast %cst : f32 to vector<8x128xf32>
    %8 = arith.mulf %7, %6 : vector<8x128xf32>
    %cst_6 = arith.constant 1.000000e+00 : f32
    %9 = vector.broadcast %cst_6 : f32 to vector<8x128xf32>
    %10 = arith.subf %8, %9 : vector<8x128xf32>
    %cst_7 = arith.constant -1.000000e+00 : f32
    %cst_8 = arith.constant 1.000000e+00 : f32
    %11 = vector.broadcast %cst_7 : f32 to vector<8x128xf32>
    %12 = arith.maximumf %11, %10 : vector<8x128xf32>
    %13 = vector.broadcast %cst_8 : f32 to vector<8x128xf32>
    %14 = arith.minimumf %13, %12 : vector<8x128xf32>
    %15 = arith.truncf %14 : vector<8x128xf32> to vector<8x128xbf16>
    %c0_9 = arith.constant 0 : index
    %c0_10 = arith.constant 0 : index
    %c0_11 = arith.constant 0 : index
    %16 = vector.load %arg5[%c0_9, %c0_10, %c0_11] : memref<1x8x128xbf16, #tpu.memory_space<vmem>>, vector<1x8x128xbf16>
    %17 = vector.shape_cast %16 : vector<1x8x128xbf16> to vector<8x128xbf16>
    %18 = vector.shape_cast %15 : vector<8x128xbf16> to vector<1x8x128xbf16>
    tpu.vector_store %arg5[%c0_9, %c0_10, %c0_11], %18 {strides = array<i32>} : memref<1x8x128xbf16, #tpu.memory_space<vmem>>, vector<1x8x128xbf16>,
    return
  }
  func.func @transform_0(%arg0: i32, %arg1: i32) -> (i32, i32, i32) {
    %c0_i32 = arith.constant 0 : i32
    %c0_i32_0 = arith.constant 0 : i32
    return %arg1, %arg0, %c0_i32 : i32, i32, i32
  }
  func.func @transform_1(%arg0: i32, %arg1: i32) -> (i32, i32) {
    %c0_i32 = arith.constant 0 : i32
    %c0_i32_0 = arith.constant 0 : i32
    return %arg0, %c0_i32 : i32, i32
  }
  func.func @transform_2(%arg0: i32, %arg1: i32) -> (i32, i32) {
    %c0_i32 = arith.constant 0 : i32
    %c0_i32_0 = arith.constant 0 : i32
    return %arg0, %c0_i32 : i32, i32
  }
  func.func @transform_3(%arg0: i32, %arg1: i32) -> (i32, i32, i32) {
    %c0_i32 = arith.constant 0 : i32
    %c0_i32_0 = arith.constant 0 : i32
    return %arg1, %arg0, %c0_i32 : i32, i32, i32
  }
}

</mosaic_0001>

<llo_original>
// kernel: tpu_custom_call.1
$region0: #{tpu_custom_call.1}
  #allocation0 [shape = 'u32[]', space=smem, size = 0x4, offset = 0x4, fixed_abs, tag = 'smem constant byte address 0x4 - core index']
  #allocation1 [shape = 'u32[144,128]{1,0:T(1,128)}', space=vmem, size = 0x12000, scoped, tag = 'internal scratch']
  %s0 = inlined_call_operand.hbm [shape: f32[2,8,128], index: 0, kind: input, shape index: {}]
  %s1 = inlined_call_operand.hbm [shape: f32[8,128], index: 1, kind: input, shape index: {}]
  %s2 = inlined_call_operand.hbm [shape: f32[8,128], index: 2, kind: input, shape index: {}]
  %s3 = inlined_call_operand.hbm [shape: bf16[2,8,128], index: 3, kind: output, shape index: {}]
  %s4 = sld [smem:[#allocation0]]
  $region57: #{tpu_custom_call.1} parent=0
    _
  %s6 = ssub.s32 1, %s4
  %s7 = scalar_select 0, %s6, %s4
  $region1: #{tpu_custom_call.1} parent=0
    #allocation2 [shape = 'u8[8192]{0}', space=vmem, size = 0x2000, scoped, tag = 'input window, operand 0']
    #allocation3 [shape = 's32[2]{0}', space=sflag, size = 0x8, scoped, tag = 'scoped memory for tpu_custom_call.1']
    #allocation4 [shape = 's32[2]{0}', space=sflag, size = 0x8, scoped, tag = 'scoped memory for tpu_custom_call.1']
    #allocation5 [shape = 'u8[4096]{0}', space=vmem, size = 0x1000, scoped, tag = 'input window, operand 1, single buffered']
    #allocation6 [shape = 's32[1]{0}', space=sflag, size = 0x4, scoped, tag = 'scoped memory for tpu_custom_call.1']
    #allocation7 [shape = 'u8[4096]{0}', space=vmem, size = 0x1000, scoped, tag = 'input window, operand 2, single buffered']
    #allocation8 [shape = 'u8[4096]{0}', space=vmem, size = 0x1000, scoped, tag = 'output window, operand 0']
    %8 = vsyncpa [#allocation3], 0
    %s9 = scalar_lea.sflag [#allocation3], 1
    %10 = vsyncpa %s9, 0
    %11 = vsyncpa [#allocation6], 0
    %12 = vsyncpa [#allocation4], 0
    %s13 = scalar_lea.sflag [#allocation4], 1
    %14 = vsyncpa %s13, 0
    loop: start=0, step=1, limit=4
    $region2: #{tpu_custom_call.1} parent=1 // loop_pre_header
      _
    $region3: #{tpu_custom_call.1} parent=1 // loop_header
      %s16 = sphi 0, %s20
      %p17 = scmp.ge.s32.totalorder %s16, 4
      %s23 = sphi 0, %s35
      %s24 = sphi 0, %s31
      %s25 = sphi 0, %s23
      %s26 = sphi 0, %s24
      %s27 = sphi 0, %s25
      %s28 = sphi 0, %s26
      %s40 = sphi 0, %s42
      %s43 = sphi 0, %s40
      %s44 = sphi 0, %s43
      %s60 = sphi 0, %s44
      %s66 = sphi 0, %s68
      %s69 = sphi 0, %s66
      %s70 = sphi 0, %s69
      %s86 = sphi 0, %s70
      %s92 = sphi 0, %s94
      %s95 = sphi 0, %s92
      %s96 = sphi 0, %s95
      %s112 = sphi 0, %s96
      %s120 = sphi 0, %s122
      %s123 = sphi 0, %s120
      %s124 = sphi 0, %s123
      %s140 = sphi 0, %s124
    $region4: #{tpu_custom_call.1} parent=1 // loop_header_branch
      %19 = sbr.rel (%p17) target = $region8
    $region5: #{tpu_custom_call.1} parent=1 // loop_body
      %s21 = ssub.s32 %s16, 1
      %s22 = ssub.s32 %s16, 2
      %s29 = sadd.s32 1, %s24
      %p30 = scmp.ge.s32.totalorder %s29, 2
      %s31 = scalar_select %p30, 0, %s29
      %s32 = sadd.s32 1, %s23
      %s33 = scalar_select %p30, %s32, %s23
      %p34 = scmp.ge.s32.totalorder %s33, 1
      %s35 = scalar_select %p34, 0, %s33
      %s36 = ssub.s32 %s24, %s31
      %s37 = ssub.s32 %s23, %s35
      %s38 = sor.u32 %s36, %s37
      %p39 = scmp.eq.s32.totalorder %s38, 0
      %s41 = sadd.s32 %s40, 1
      %s42 = scalar_select %p39, %s40, %s41
      %p45 = pneg %p39
      %p46 = scmp.eq.s32.totalorder %s16, 1
      %p47 = por %p45, %p46
      %p48 = scmp.ne.s32.totalorder %s40, %s43
      %p49 = scmp.eq.s32.totalorder %s16, 0
      %p50 = por %p48, %p49
      %p51 = scmp.ne.s32.totalorder %s40, %s43
      %p52 = scmp.eq.s32.totalorder %s21, 1
      %p53 = por %p51, %p52
      %p54 = scmp.ne.s32.totalorder %s43, %s44
      %p55 = scmp.eq.s32.totalorder %s21, 0
      %p56 = por %p54, %p55
      %p57 = scmp.ne.s32.totalorder %s43, %s44
      %p58 = scmp.eq.s32.totalorder %s22, 1
      %p59 = por %p57, %p58
      %p61 = scmp.ne.s32.totalorder %s44, %s60
      %p62 = scmp.eq.s32.totalorder %s22, 0
      %p63 = por %p61, %p62
      %s64 = ssub.s32 %s23, %s35
      %p65 = scmp.eq.s32.totalorder %s64, 0
      %s67 = sadd.s32 %s66, 1
      %s68 = scalar_select %p65, %s66, %s67
      %p71 = pneg %p65
      %p72 = scmp.eq.s32.totalorder %s16, 1
      %p73 = por %p71, %p72
      %p74 = scmp.ne.s32.totalorder %s66, %s69
      %p75 = scmp.eq.s32.totalorder %s16, 0
      %p76 = por %p74, %p75
      %p77 = scmp.ne.s32.totalorder %s66, %s69
      %p78 = scmp.eq.s32.totalorder %s21, 1
      %p79 = por %p77, %p78
      %p80 = scmp.ne.s32.totalorder %s69, %s70
      %p81 = scmp.eq.s32.totalorder %s21, 0
      %p82 = por %p80, %p81
      %p83 = scmp.ne.s32.totalorder %s69, %s70
      %p84 = scmp.eq.s32.totalorder %s22, 1
      %p85 = por %p83, %p84
      %p87 = scmp.ne.s32.totalorder %s70, %s86
      %p88 = scmp.eq.s32.totalorder %s22, 0
      %p89 = por %p87, %p88
      %s90 = ssub.s32 %s23, %s35
      %p91 = scmp.eq.s32.totalorder %s90, 0
      %s93 = sadd.s32 %s92, 1
      %s94 = scalar_select %p91, %s92, %s93
      %p97 = pneg %p91
      %p98 = scmp.eq.s32.totalorder %s16, 1
      %p99 = por %p97, %p98
      %p100 = scmp.ne.s32.totalorder %s92, %s95
      %p101 = scmp.eq.s32.totalorder %s16, 0
      %p102 = por %p100, %p101
      %p103 = scmp.ne.s32.totalorder %s92, %s95
      %p104 = scmp.eq.s32.totalorder %s21, 1
      %p105 = por %p103, %p104
      %p106 = scmp.ne.s32.totalorder %s95, %s96
      %p107 = scmp.eq.s32.totalorder %s21, 0
      %p108 = por %p106, %p107
      %p109 = scmp.ne.s32.totalorder %s95, %s96
      %p110 = scmp.eq.s32.totalorder %s22, 1
      %p111 = por %p109, %p110
      %p113 = scmp.ne.s32.totalorder %s96, %s112
      %p114 = scmp.eq.s32.totalorder %s22, 0
      %p115 = por %p113, %p114
      %s116 = ssub.s32 %s24, %s31
      %s117 = ssub.s32 %s23, %s35
      %s118 = sor.u32 %s116, %s117
      %p119 = scmp.eq.s32.totalorder %s118, 0
      %s121 = sadd.s32 %s120, 1
      %s122 = scalar_select %p119, %s120, %s121
      %p125 = pneg %p119
      %p126 = scmp.eq.s32.totalorder %s16, 1
      %p127 = por %p125, %p126
      %p128 = scmp.ne.s32.totalorder %s120, %s123
      %p129 = scmp.eq.s32.totalorder %s16, 0
      %p130 = por %p128, %p129
      %p131 = scmp.ne.s32.totalorder %s120, %s123
      %p132 = scmp.eq.s32.totalorder %s21, 1
      %p133 = por %p131, %p132
      %p134 = scmp.ne.s32.totalorder %s123, %s124
      %p135 = scmp.eq.s32.totalorder %s21, 0
      %p136 = por %p134, %p135
      %p137 = scmp.ne.s32.totalorder %s123, %s124
      %p138 = scmp.eq.s32.totalorder %s22, 1
      %p139 = por %p137, %p138
      %p141 = scmp.ne.s32.totalorder %s124, %s140
      %p142 = scmp.eq.s32.totalorder %s22, 0
      %p143 = por %p141, %p142
      %p144 = scmp.le.s32.totalorder 1, %s16
      %p145 = scmp.lt.s32.totalorder %s16, 3
      %p146 = pnand %p144, %p145
      %p147 = pneg %p146
      // Predicated region
      $region9: #{tpu_custom_call.1} parent=5 // pred_check
        _
      $region10: #{tpu_custom_call.1} parent=5 // pred_check_branch
        %149 = sbr.rel (%p146) target = $region12
      $region11: #{tpu_custom_call.1} parent=5 // pred_region
        %s150 = ssub.s32 %s16, 1
        // Predicated region
        $region13: #{tpu_custom_call.1} parent=11 // pred_check
          %p151 = pneg %p82
        $region14: #{tpu_custom_call.1} parent=11 // pred_check_branch
          %153 = sbr.rel (%p151) target = $region16
        $region15: #{tpu_custom_call.1} parent=11 // pred_region
          %s155 = ssub.s32 128, 128
          %156 = vsyncadd [#allocation6], %s155
          %s157 = smul.addr %s25, 128
          %s158 = scalar_lea.hbm %s1, %s157
          %s160 = sshll.u32 [#allocation5], 4
          %s161 = int_to_ptr.vmem [resolvable:$true] %s160
          %163 = dma.hbm_to_vmem [thread:$0]  %s158, 128, %s161, [#allocation6]
        $region16: #{tpu_custom_call.1} parent=11 // pred_fallthru
          _
        // Predicated region
        $region17: #{tpu_custom_call.1} parent=11 // pred_check
          %p164 = pneg %p108
        $region18: #{tpu_custom_call.1} parent=11 // pred_check_branch
          %166 = sbr.rel (%p164) target = $region20
        $region19: #{tpu_custom_call.1} parent=11 // pred_region
          %s168 = ssub.s32 128, 128
          %169 = vsyncadd [#allocation6], %s168
          %s170 = smul.addr %s25, 128
          %s171 = scalar_lea.hbm %s2, %s170
          %s173 = sshll.u32 [#allocation7], 4
          %s174 = int_to_ptr.vmem [resolvable:$true] %s173
          %176 = dma.hbm_to_vmem [thread:$0]  %s171, 128, %s174, [#allocation6]
        $region20: #{tpu_custom_call.1} parent=11 // pred_fallthru
          _
      $region12: #{tpu_custom_call.1} parent=5 // pred_fallthru
        _
      %p177 = scmp.lt.s32.totalorder %s16, 2
      // Predicated region
      $region21: #{tpu_custom_call.1} parent=5 // pred_check
        %p178 = pneg %p177
      $region22: #{tpu_custom_call.1} parent=5 // pred_check_branch
        %180 = sbr.rel (%p178) target = $region24
      $region23: #{tpu_custom_call.1} parent=5 // pred_region
        // Predicated region
        $region25: #{tpu_custom_call.1} parent=23 // pred_check
          %p181 = pneg %p50
        $region26: #{tpu_custom_call.1} parent=23 // pred_check_branch
          %183 = sbr.rel (%p181) target = $region28
        $region27: #{tpu_custom_call.1} parent=23 // pred_region
          %s184 = sand.u32 %s40, 1
          %s185 = scalar_lea.sflag [#allocation3], %s184
          %s186 = sand.u32 %s40, 1
          %s187 = smul.addr %s186, 8
          %s188 = scalar_lea.vmem [#allocation2], %s187
          %s190 = ssub.s32 128, 128
          %191 = vsyncadd %s185, %s190
          %s192 = sadd.s32 %s23, %s24
          %s193 = smul.addr %s192, 128
          %s194 = scalar_lea.hbm %s0, %s193
          %s196 = sshll.u32 %s188, 4
          %s197 = int_to_ptr.vmem [resolvable:$true] %s196
          %199 = dma.hbm_to_vmem [thread:$0]  %s194, 128, %s197, %s185
        $region28: #{tpu_custom_call.1} parent=23 // pred_fallthru
          _
      $region24: #{tpu_custom_call.1} parent=5 // pred_fallthru
        _
      %p200 = scmp.le.s32.totalorder 1, %s16
      %p201 = scmp.lt.s32.totalorder %s16, 3
      %p202 = pnand %p200, %p201
      %p203 = pneg %p202
      // Predicated region
      $region29: #{tpu_custom_call.1} parent=5 // pred_check
        _
      $region30: #{tpu_custom_call.1} parent=5 // pred_check_branch
        %205 = sbr.rel (%p202) target = $region32
      $region31: #{tpu_custom_call.1} parent=5 // pred_region
        %s206 = ssub.s32 %s16, 1
        %s207 = sand.u32 %s43, 1
        %s208 = scalar_lea.sflag [#allocation3], %s207
        %s209 = sand.u32 %s43, 1
        %s210 = smul.addr %s209, 8
        %s211 = scalar_lea.vmem [#allocation2], %s210
        // Predicated region
        $region33: #{tpu_custom_call.1} parent=31 // pred_check
          %p212 = pneg %p56
        $region34: #{tpu_custom_call.1} parent=31 // pred_check_branch
          %214 = sbr.rel (%p212) target = $region36
        $region35: #{tpu_custom_call.1} parent=31 // pred_region
          %215 = dma.done %s208, 128
        $region36: #{tpu_custom_call.1} parent=31 // pred_fallthru
          _
        // Predicated region
        $region37: #{tpu_custom_call.1} parent=31 // pred_check
          %p216 = pneg %p82
        $region38: #{tpu_custom_call.1} parent=31 // pred_check_branch
          %218 = sbr.rel (%p216) target = $region40
        $region39: #{tpu_custom_call.1} parent=31 // pred_region
          %219 = dma.done [#allocation6], 128
        $region40: #{tpu_custom_call.1} parent=31 // pred_fallthru
          _
        // Predicated region
        $region41: #{tpu_custom_call.1} parent=31 // pred_check
          %p220 = pneg %p108
        $region42: #{tpu_custom_call.1} parent=31 // pred_check_branch
          %222 = sbr.rel (%p220) target = $region44
        $region43: #{tpu_custom_call.1} parent=31 // pred_region
          %223 = dma.done [#allocation6], 128
        $region44: #{tpu_custom_call.1} parent=31 // pred_fallthru
          _
        %s224 = sand.u32 %s43, 1
        %s225 = scalar_lea.sflag [#allocation3], %s224
        %s226 = sand.u32 %s43, 1
        %s227 = smul.addr %s226, 8
        %s228 = scalar_lea.vmem [#allocation2], %s227
        %p229 = pneg %p56
        %p230 = pneg %p53
        %p231 = pneg %p82
        %p232 = pneg %p79
        %p233 = pneg %p108
        %p234 = pneg %p105
        %p235 = pneg %p136
        %p236 = pneg %p133
        %s237 = sand.u32 %s123, 1
        %s238 = scalar_lea.sflag [#allocation4], %s237
        %s239 = sand.u32 %s123, 1
        %s240 = smul.addr %s239, 4
        %s241 = scalar_lea.vmem [#allocation8], %s240
        %v242 = vld [vmem:[%s211] sm:$0xff]
        %v243 = vld [vmem:[#allocation5] sm:$0xff]
        %v244 = vld [vmem:[#allocation7] sm:$0xff]
        %v245 = vsub.f32 %v243, %v242
        %v246 = vmul.f32 %v244, %v245
        %v247 = vadd.f32 %v242, %v246
        %v248 = vmul.f32 %v247, 2.0
        %v249 = vsub.f32 %v248, 1.0
        %v250 = vmax.f32 %v249, -1.0
        %v251 = vmin.f32 %v250, 1.0
        %v252 = vpack.c.bf16 %v251, %v251
        %253 = vst [vmem:[%s241] sm:$0xf] %v252
        %s254 = sand.u32 %s123, 1
        %s255 = scalar_lea.sflag [#allocation4], %s254
        %s256 = sand.u32 %s123, 1
        %s257 = smul.addr %s256, 4
        %s258 = scalar_lea.vmem [#allocation8], %s257
        // Predicated region
        $region45: #{tpu_custom_call.1} parent=31 // pred_check
          %p259 = pneg %p133
        $region46: #{tpu_custom_call.1} parent=31 // pred_check_branch
          %261 = sbr.rel (%p259) target = $region48
        $region47: #{tpu_custom_call.1} parent=31 // pred_region
          %s263 = ssub.s32 64, 64
          %264 = vsyncadd %s255, %s263
          %s265 = sadd.s32 %s25, %s26
          %s266 = smul.addr %s265, 64
          %s267 = scalar_lea.hbm %s3, %s266
          %s269 = sshll.u32 %s258, 4
          %s270 = int_to_ptr.vmem [resolvable:$true] %s269
          %272 = dma.vmem_to_hbm [thread:$0]  %s270, 64, %s267, %s255
        $region48: #{tpu_custom_call.1} parent=31 // pred_fallthru
          _
      $region32: #{tpu_custom_call.1} parent=5 // pred_fallthru
        _
      %p273 = scmp.le.s32.totalorder 2, %s16
      // Predicated region
      $region49: #{tpu_custom_call.1} parent=5 // pred_check
        %p274 = pneg %p273
      $region50: #{tpu_custom_call.1} parent=5 // pred_check_branch
        %276 = sbr.rel (%p274) target = $region52
      $region51: #{tpu_custom_call.1} parent=5 // pred_region
        %s277 = ssub.s32 %s16, 2
        // Predicated region
        $region53: #{tpu_custom_call.1} parent=51 // pred_check
          %p278 = pneg %p139
        $region54: #{tpu_custom_call.1} parent=51 // pred_check_branch
          %280 = sbr.rel (%p278) target = $region56
        $region55: #{tpu_custom_call.1} parent=51 // pred_region
          %s281 = sand.u32 %s124, 1
          %s282 = scalar_lea.sflag [#allocation4], %s281
          %s283 = sand.u32 %s124, 1
          %s284 = smul.addr %s283, 4
          %s285 = scalar_lea.vmem [#allocation8], %s284
          %286 = dma.done %s282, 64
        $region56: #{tpu_custom_call.1} parent=51 // pred_fallthru
          _
      $region52: #{tpu_custom_call.1} parent=5 // pred_fallthru
        _
    $region6: #{tpu_custom_call.1} parent=1 // loop_footer
      %s20 = sadd.s32 1, %s16
    $region7: #{tpu_custom_call.1} parent=1 // loop_footer_branch
      %15 = sbr.rel target = $region3
    $region8: #{tpu_custom_call.1} parent=1 // loop_exit
      _
    %287 = vsyncpa [#allocation3], 1
    %s288 = scalar_lea.sflag [#allocation3], 1
    %289 = vsyncpa %s288, 1
    %290 = vsyncpa [#allocation6], 1
    %291 = vsyncpa [#allocation4], 1
    %s292 = scalar_lea.sflag [#allocation4], 1
    %293 = vsyncpa %s292, 1

</llo_original>
